<compile_context>
chip_gen: v7x
topology: tpu7x:2x2x1
jax: 0.10.0
libtpu: 0.0.40
codegen_flags: <defaults>
</compile_context>

<pallas_src>
import jax
import jax.numpy as jnp
from jax import lax
from jax.experimental import pallas as pl
from jax.experimental.pallas import tpu as pltpu


def _round_up(x, m):
    return (x + m - 1) // m * m


def _vmem_capacity_bytes():
    try:
        info = pltpu.get_tpu_info()
        for attr in ("vmem_capacity_bytes", "vmem_bytes", "vmem_size_bytes"):
            v = getattr(info, attr, None)
            if v:
                return int(v)
    except Exception:
        pass
    return 64 * 1024 * 1024  # conservative fallback (v7x per-core VMEM)


def _pad_cast(x, shape, dtype):
    if tuple(x.shape) == tuple(shape):
        return x.astype(dtype)
    out = jnp.zeros(shape, dtype)
    return out.at[tuple(slice(0, s) for s in x.shape)].set(x.astype(dtype))


def _dpp_kernel(x1_ref, x2_ref, w1t_ref, w2t_ref, b2_ref, o_ref, x2o_ref):
    Bt, tL1, D = x1_ref.shape
    _, L2m, _ = x2_ref.shape
    Hp = w1t_ref.shape[1]
    L2s = x2o_ref.shape[1]
    cdt = x2o_ref.dtype

    # x2 projection: once per batch tile.  The L1-tile axis is innermost and
    # "arbitrary", and x2's index_map is constant along it, so its block is not
    # re-DMA'd and the projection is not recomputed per L1 tile.
    @pl.when(pl.program_id(1) == 0)
    def _():
        x2_flat = x2_ref[...].reshape(Bt * L2m, D)
        x2_o = jnp.maximum(
            jnp.dot(x2_flat, w2t_ref[...], preferred_element_type=jnp.float32)
            + b2_ref[...], 0.0)
        x2_o = x2_o.astype(cdt).reshape(Bt, L2m, Hp)
        if L2s > L2m:  # zero-fill the lane padding of the output inside VMEM
            x2o_ref[...] = jnp.zeros_like(x2o_ref)
            x2o_ref[:, :L2m, :] = x2_o
        else:
            x2o_ref[...] = x2_o

    # x1 projection with the batch folded into the MXU M dimension.
    x1_flat = x1_ref[...].reshape(Bt * tL1, D)
    x1_o = jnp.maximum(
        jnp.dot(x1_flat, w1t_ref[...], preferred_element_type=jnp.float32), 0.0)
    x1_o = x1_o.astype(cdt).reshape(Bt, tL1, Hp)

    # Batched scores: contract over H without materializing a transpose.
    # TODO(synk): for tiny L1 with large L2 the MXU M dim here is L1 (underfilled
    # on the 256-wide v6e/v7x MXU); a transposed-output variant would fix that.
    scores = lax.dot_general(
        x1_o, x2o_ref[...],
        dimension_numbers=(((2,), (2,)), ((0,), (0,))),
        preferred_element_type=jnp.float32)
    o_ref[...] = scores.astype(o_ref.dtype)


def similarity_wrapper(x1, x2, w1, w2, b2, *,
                       compute_dtype=jnp.bfloat16,
                       out_dtype=jnp.float32,
                       l1_tile=256):
    """x1: (B, L1, D), x2: (B, L2, D), w1: (H, D), w2: (H, D), b2: (H,).

    Returns scores of shape (B, L1, L2) in `out_dtype` (float32 by default).
    """
    B, L1, D = x1.shape
    B2, L2, D2 = x2.shape
    assert D == D2, "x1.size(2) must equal x2.size(2)"
    assert B == B2, "batch dims must match"
    H = w1.shape[0]

    Hp = _round_up(H, 128)   # lane-dense projections (zero weight cols + zero bias)
    L1m = _round_up(L1, 8)   # sublane-dense rows: cheap <=7-row host pad
    L2m = _round_up(L2, 8)

    cbytes = jnp.dtype(compute_dtype).itemsize
    obytes = jnp.dtype(out_dtype).itemsize

    vmem_bytes = _vmem_capacity_bytes()
    vmem_limit_bytes = (vmem_bytes * 3) // 4   # ~96 MiB v5e/v6e, ~48 MiB v7x
    block_budget = vmem_bytes // 4             # ~32 MiB v5e/v6e, ~16 MiB v7x

    def footprint(bt, tl1, l2out, l2scr):
        # 2x: double-buffered pipelined blocks (x1, x2, out) + weights.
        pipelined = 2 * bt * (tl1 * D * cbytes + L2m * D * cbytes
                              + tl1 * l2out * obytes)
        pipelined += 2 * (2 * D * Hp * cbytes + Hp * 4)
        # 1x: resident scratch + in-flight f32 intermediates.
        resident = (bt * l2scr * Hp * cbytes       # x2_o scratch (compute dtype)
                    + bt * tl1 * Hp * 4            # x1_o f32 (pre-cast)
                    + bt * L2m * Hp * 4            # x2_o f32 (pre-cast)
                    + bt * tl1 * l2out * 4)        # scores f32 accumulator
        return pipelined + resident

    if footprint(1, L1m, L2m, L2m) <= block_budget:
        # Whole L1 extent per step: no lane padding of the output needed.
        tL1, L1p, L2out, L2scr = L1m, L1m, L2m, L2m
    else:
        # Tile L1; the out block's last dim must then be a multiple of 128.
        L2out = _round_up(L2, 128)
        L2scr = L2out
        tL1 = min(l1_tile, L1m)
        while tL1 > 8 and footprint(1, tL1, L2out, L2scr) > block_budget:
            tL1 = max(8, tL1 // 2)
        # TODO(synk): add an L2 grid axis if even (Bt=1, tL1=8) exceeds the budget.
        L1p = _round_up(L1, tL1)

    per_batch = footprint(1, tL1, L2out, L2scr)
    Bt = int(max(1, min(B, block_budget // max(per_batch, 1))))
    # >= 2 steps on the parallel batch axis (v7x megacore + DMA/compute overlap),
    # >= 4 once B >= 4.
    Bt = min(Bt, max(1, -(-B // 4)))
    Bp = _round_up(B, Bt)
    nb = Bp // Bt
    nl1 = L1p // tL1

    # Parameters: bf16 weights with zero-padded H columns; f32 bias (zero-padded
    # lanes keep the padded H columns exactly 0 after relu).
    w1t = _pad_cast(w1.T, (D, Hp), compute_dtype)
    w2t = _pad_cast(w2.T, (D, Hp), compute_dtype)
    b2p = _pad_cast(b2.reshape(1, H), (1, Hp), jnp.float32)

    x1p = _pad_cast(x1, (Bp, L1p, D), compute_dtype)
    x2p = _pad_cast(x2, (Bp, L2m, D), compute_dtype)

    out = pl.pallas_call(
        _dpp_kernel,
        out_shape=jax.ShapeDtypeStruct((Bp, L1p, L2out), out_dtype),
        grid_spec=pltpu.PrefetchScalarGridSpec(
            num_scalar_prefetch=0,
            grid=(nb, nl1),
            in_specs=[
                pl.BlockSpec((Bt, tL1, D), lambda b, i: (b, i, 0)),
                pl.BlockSpec((Bt, L2m, D), lambda b, i: (b, 0, 0)),
                pl.BlockSpec((D, Hp), lambda b, i: (0, 0)),
                pl.BlockSpec((D, Hp), lambda b, i: (0, 0)),
                pl.BlockSpec((1, Hp), lambda b, i: (0, 0)),
            ],
            out_specs=pl.BlockSpec((Bt, tL1, L2out), lambda b, i: (b, i, 0)),
            scratch_shapes=[pltpu.VMEM((Bt, L2scr, Hp), compute_dtype)],
        ),
        compiler_params=pltpu.CompilerParams(
            dimension_semantics=("parallel", "arbitrary"),
            vmem_limit_bytes=int(vmem_limit_bytes)),
    )(x1p, x2p, w1t, w2t, b2p)

    return out[:B, :L1, :L2]


if __name__ == "__main__":
    # Small shapes consistent with the module's forward.
    B, L1, L2, D, H = 2, 8, 8, 32, 64

    key = jax.random.PRNGKey(0)
    k1, k2, k3, k4, k5 = jax.random.split(key, 5)
    x1 = jax.random.normal(k1, (B, L1, D), dtype=jnp.float32)
    x2 = jax.random.normal(k2, (B, L2, D), dtype=jnp.float32)
    # nn.Linear weight layout: (out, in).
    w1 = jax.random.normal(k3, (H, D), dtype=jnp.float32) * 0.1   # proj_1, no bias
    w2 = jax.random.normal(k4, (H, D), dtype=jnp.float32) * 0.1   # proj_2
    b2 = jax.random.normal(k5, (H,), dtype=jnp.float32) * 0.1     # proj_2 bias

    scores = jax.block_until_ready(similarity_wrapper(x1, x2, w1, w2, b2))

    # Pure-JAX f32 reference (kernel uses a bf16 MXU path -> modest tolerance).
    x1_o = jax.nn.relu(jnp.einsum("bld,hd->blh", x1, w1))
    x2_o = jax.nn.relu(jnp.einsum("bld,hd->blh", x2, w2) + b2)
    ref = jnp.einsum("blh,bmh->blm", x1_o, x2_o)
    assert scores.shape == (B, L1, L2)
    assert jnp.allclose(scores, ref, atol=5e-2, rtol=5e-2), float(
        jnp.max(jnp.abs(scores - ref)))

    # Second tiny case with non-aligned shapes to exercise padding / slicing.
    Bb, L1b, L2b, Db = 3, 5, 7, 20
    kk = jax.random.split(jax.random.PRNGKey(1), 5)
    x1b = jax.random.normal(kk[0], (Bb, L1b, Db), dtype=jnp.float32)
    x2b = jax.random.normal(kk[1], (Bb, L2b, Db), dtype=jnp.float32)
    w1b = jax.random.normal(kk[2], (H, Db), dtype=jnp.float32) * 0.1
    w2b = jax.random.normal(kk[3], (H, Db), dtype=jnp.float32) * 0.1
    b2b = jax.random.normal(kk[4], (H,), dtype=jnp.float32) * 0.1
    s2 = jax.block_until_ready(similarity_wrapper(x1b, x2b, w1b, w2b, b2b))
    r1 = jax.nn.relu(jnp.einsum("bld,hd->blh", x1b, w1b))
    r2 = jax.nn.relu(jnp.einsum("bld,hd->blh", x2b, w2b) + b2b)
    ref2 = jnp.einsum("blh,bmh->blm", r1, r2)
    assert s2.shape == (Bb, L1b, L2b)
    assert jnp.allclose(s2, ref2, atol=5e-2, rtol=5e-2), float(
        jnp.max(jnp.abs(s2 - ref2)))

    print("KERNEL_OK")
</pallas_src>

<mosaic_0001>
module attributes {stable_mosaic.version = 11 : i64} {
  func.func @_dpp_kernel(%arg0: i32, %arg1: i32, %arg2: memref<1x8x32xbf16, #tpu.memory_space<vmem>>, %arg3: memref<1x8x32xbf16, #tpu.memory_space<vmem>>, %arg4: memref<32x128xbf16, #tpu.memory_space<vmem>>, %arg5: memref<32x128xbf16, #tpu.memory_space<vmem>>, %arg6: memref<1x128xf32, #tpu.memory_space<vmem>>, %arg7: memref<1x8x8xf32, #tpu.memory_space<vmem>>, %arg8: memref<1x8x128xbf16, #tpu.memory_space<vmem>>) attributes {dimension_semantics = [#tpu.dimension_semantics<parallel>, #tpu.dimension_semantics<arbitrary>], iteration_bounds = array<i64: 2, 1>, scalar_prefetch = 0 : i64, scratch_operands = 1 : i64, tpu.core_type = #tpu.core_type<tc>, window_params = [{transform_indices = @transform_0, window_bounds = array<i64: 1, 8, 32>}, {transform_indices = @transform_1, window_bounds = array<i64: 1, 8, 32>}, {pipeline_mode = #tpu.pipeline_mode<synchronous>, transform_indices = @transform_2, window_bounds = array<i64: 32, 128>}, {pipeline_mode = #tpu.pipeline_mode<synchronous>, transform_indices = @transform_3, window_bounds = array<i64: 32, 128>}, {pipeline_mode = #tpu.pipeline_mode<synchronous>, transform_indices = @transform_4, window_bounds = array<i64: 1, 128>}, {transform_indices = @transform_5, window_bounds = array<i64: 1, 8, 8>}]} {
    %c0_i32 = arith.constant 0 : i32
    %0 = arith.cmpi eq, %arg1, %c0_i32 : i32
    %1 = arith.extui %0 : i1 to i32
    %c0_i32_0 = arith.constant 0 : i32
    %2 = arith.cmpi ne, %1, %c0_i32_0 : i32
    scf.if %2 {
      %c0_13 = arith.constant 0 : index
      %c0_14 = arith.constant 0 : index
      %c0_15 = arith.constant 0 : index
      %14 = vector.load %arg3[%c0_13, %c0_14, %c0_15] : memref<1x8x32xbf16, #tpu.memory_space<vmem>>, vector<1x8x32xbf16>
      %15 = vector.shape_cast %14 : vector<1x8x32xbf16> to vector<8x32xbf16>
      %c0_16 = arith.constant 0 : index
      %c0_17 = arith.constant 0 : index
      %16 = vector.load %arg5[%c0_16, %c0_17] : memref<32x128xbf16, #tpu.memory_space<vmem>>, vector<32x128xbf16>
      %cst_18 = arith.constant dense<0.000000e+00> : vector<8x128xf32>
      %17 = tpu.matmul %15, %16, %cst_18 {dimension_numbers = #tpu.dot_dimension_numbers<[1], [0], [0], [1], [0, 0, 1, 1], [], []>} : vector<8x32xbf16>, vector<32x128xbf16>, vector<8x128xf32> -> vector<8x128xf32>
      %c0_19 = arith.constant 0 : index
      %c0_20 = arith.constant 0 : index
      %18 = vector.load %arg6[%c0_19, %c0_20] : memref<1x128xf32, #tpu.memory_space<vmem>>, vector<1x128xf32>
      %19 = vector.broadcast %18 : vector<1x128xf32> to vector<8x128xf32>
      %20 = arith.addf %17, %19 : vector<8x128xf32>
      %cst_21 = arith.constant 0.000000e+00 : f32
      %21 = vector.broadcast %cst_21 : f32 to vector<8x128xf32>
      %22 = arith.maximumf %20, %21 : vector<8x128xf32>
      %23 = arith.truncf %22 : vector<8x128xf32> to vector<8x128xbf16>
      %24 = vector.shape_cast %23 : vector<8x128xbf16> to vector<1x8x128xbf16>
      %c0_22 = arith.constant 0 : index
      %c0_23 = arith.constant 0 : index
      %c0_24 = arith.constant 0 : index
      %25 = vector.load %arg8[%c0_22, %c0_23, %c0_24] : memref<1x8x128xbf16, #tpu.memory_space<vmem>>, vector<1x8x128xbf16>
      tpu.vector_store %arg8[%c0_22, %c0_23, %c0_24], %24 {strides = array<i32>} : memref<1x8x128xbf16, #tpu.memory_space<vmem>>, vector<1x8x128xbf16>,
    } else {
    }
    %c0 = arith.constant 0 : index
    %c0_1 = arith.constant 0 : index
    %c0_2 = arith.constant 0 : index
    %3 = vector.load %arg2[%c0, %c0_1, %c0_2] : memref<1x8x32xbf16, #tpu.memory_space<vmem>>, vector<1x8x32xbf16>
    %4 = vector.shape_cast %3 : vector<1x8x32xbf16> to vector<8x32xbf16>
    %c0_3 = arith.constant 0 : index
    %c0_4 = arith.constant 0 : index
    %5 = vector.load %arg4[%c0_3, %c0_4] : memref<32x128xbf16, #tpu.memory_space<vmem>>, vector<32x128xbf16>
    %cst = arith.constant dense<0.000000e+00> : vector<8x128xf32>
    %6 = tpu.matmul %4, %5, %cst {dimension_numbers = #tpu.dot_dimension_numbers<[1], [0], [0], [1], [0, 0, 1, 1], [], []>} : vector<8x32xbf16>, vector<32x128xbf16>, vector<8x128xf32> -> vector<8x128xf32>
    %cst_5 = arith.constant 0.000000e+00 : f32
    %7 = vector.broadcast %cst_5 : f32 to vector<8x128xf32>
    %8 = arith.maximumf %6, %7 : vector<8x128xf32>
    %9 = arith.truncf %8 : vector<8x128xf32> to vector<8x128xbf16>
    %10 = vector.shape_cast %9 : vector<8x128xbf16> to vector<1x8x128xbf16>
    %c0_6 = arith.constant 0 : index
    %c0_7 = arith.constant 0 : index
    %c0_8 = arith.constant 0 : index
    %11 = vector.load %arg8[%c0_6, %c0_7, %c0_8] : memref<1x8x128xbf16, #tpu.memory_space<vmem>>, vector<1x8x128xbf16>
    %cst_9 = arith.constant dense<0.000000e+00> : vector<1x8x8xf32>
    %12 = tpu.matmul %10, %11, %cst_9 {dimension_numbers = #tpu.dot_dimension_numbers<[2], [2], [1], [1], [0, 0, 0, 1, 1, 1], [0], [0]>} : vector<1x8x128xbf16>, vector<1x8x128xbf16>, vector<1x8x8xf32> -> vector<1x8x8xf32>
    %c0_10 = arith.constant 0 : index
    %c0_11 = arith.constant 0 : index
    %c0_12 = arith.constant 0 : index
    %13 = vector.load %arg7[%c0_10, %c0_11, %c0_12] : memref<1x8x8xf32, #tpu.memory_space<vmem>>, vector<1x8x8xf32>
    tpu.vector_store %arg7[%c0_10, %c0_11, %c0_12], %12 {strides = array<i32>} : memref<1x8x8xf32, #tpu.memory_space<vmem>>, vector<1x8x8xf32>,
    return
  }
  func.func @transform_0(%arg0: i32, %arg1: i32) -> (i32, i32, i32) {
    %c0_i32 = arith.constant 0 : i32
    %c0_i32_0 = arith.constant 0 : i32
    return %arg0, %arg1, %c0_i32 : i32, i32, i32
  }
  func.func @transform_1(%arg0: i32, %arg1: i32) -> (i32, i32, i32) {
    %c0_i32 = arith.constant 0 : i32
    %c0_i32_0 = arith.constant 0 : i32
    %c0_i32_1 = arith.constant 0 : i32
    return %arg0, %c0_i32, %c0_i32_0 : i32, i32, i32
  }
  func.func @transform_2(%arg0: i32, %arg1: i32) -> (i32, i32) {
    %c0_i32 = arith.constant 0 : i32
    %c0_i32_0 = arith.constant 0 : i32
    %c0_i32_1 = arith.constant 0 : i32
    return %c0_i32, %c0_i32_0 : i32, i32
  }
  func.func @transform_3(%arg0: i32, %arg1: i32) -> (i32, i32) {
    %c0_i32 = arith.constant 0 : i32
    %c0_i32_0 = arith.constant 0 : i32
    %c0_i32_1 = arith.constant 0 : i32
    return %c0_i32, %c0_i32_0 : i32, i32
  }
  func.func @transform_4(%arg0: i32, %arg1: i32) -> (i32, i32) {
    %c0_i32 = arith.constant 0 : i32
    %c0_i32_0 = arith.constant 0 : i32
    %c0_i32_1 = arith.constant 0 : i32
    return %c0_i32, %c0_i32_0 : i32, i32
  }
  func.func @transform_5(%arg0: i32, %arg1: i32) -> (i32, i32, i32) {
    %c0_i32 = arith.constant 0 : i32
    %c0_i32_0 = arith.constant 0 : i32
    return %arg0, %arg1, %c0_i32 : i32, i32, i32
  }
}

</mosaic_0001>

<llo_original>
// kernel: tpu_custom_call.1
$region0: #{tpu_custom_call.1}
  #allocation0 [shape = 'u32[]', space=smem, size = 0x4, offset = 0x4, fixed_abs, tag = 'smem constant byte address 0x4 - core index']
  #allocation1 [shape = 'u32[144,128]{1,0:T(1,128)}', space=vmem, size = 0x12000, scoped, tag = 'internal scratch']
  #allocation2 [shape = 'bf16[1,8,128]{2,1,0:T(8,128)(2,1)}', space=vmem, size = 0x800, scoped, tag = 'scratch operand']
  %s0 = inlined_call_operand.hbm [shape: bf16[2,8,32], index: 0, kind: input, shape index: {}]
  %s1 = inlined_call_operand.hbm [shape: bf16[2,8,32], index: 1, kind: input, shape index: {}]
  %s2 = inlined_call_operand.hbm [shape: bf16[32,128], index: 2, kind: input, shape index: {}]
  %s3 = inlined_call_operand.hbm [shape: bf16[32,128], index: 3, kind: input, shape index: {}]
  %s4 = inlined_call_operand.vmem [shape: f32[1,128], index: 4, kind: input, shape index: {}]
  %s5 = inlined_call_operand.hbm [shape: f32[2,8,8], index: 5, kind: output, shape index: {}]
  %s6 = sld [smem:[#allocation0]]
  $region73: #{tpu_custom_call.1} parent=0
    _
  %s8 = ssub.s32 1, %s6
  %s9 = scalar_select 0, %s8, %s6
  $region1: #{tpu_custom_call.1} parent=0
    #allocation3 [shape = 'u8[4096]{0}', space=vmem, size = 0x1000, scoped, tag = 'input window, operand 0']
    #allocation4 [shape = 's32[2]{0}', space=sflag, size = 0x8, scoped, tag = 'scoped memory for tpu_custom_call.1']
    #allocation5 [shape = 's32[2]{0}', space=sflag, size = 0x8, scoped, tag = 'scoped memory for tpu_custom_call.1']
    #allocation6 [shape = 'u8[4096]{0}', space=vmem, size = 0x1000, scoped, tag = 'input window, operand 1']
    #allocation7 [shape = 's32[2]{0}', space=sflag, size = 0x8, scoped, tag = 'scoped memory for tpu_custom_call.1']
    #allocation8 [shape = 'u8[8192]{0}', space=vmem, size = 0x2000, scoped, tag = 'input window, operand 2, single buffered']
    #allocation9 [shape = 'u8[8192]{0}', space=vmem, size = 0x2000, scoped, tag = 'input window, operand 3, single buffered']
    #allocation10 [shape = 's32[1]{0}', space=sflag, size = 0x4, scoped, tag = 'scoped memory for tpu_custom_call.1']
    #allocation11 [shape = 'u8[8192]{0}', space=vmem, size = 0x2000, scoped, tag = 'output window, operand 0']
    %10 = vsyncpa [#allocation4], 0
    %s11 = scalar_lea.sflag [#allocation4], 1
    %12 = vsyncpa %s11, 0
    %13 = vsyncpa [#allocation7], 0
    %s14 = scalar_lea.sflag [#allocation7], 1
    %15 = vsyncpa %s14, 0
    %16 = vsyncpa [#allocation10], 0
    %17 = vsyncpa [#allocation5], 0
    %s18 = scalar_lea.sflag [#allocation5], 1
    %19 = vsyncpa %s18, 0
    loop: start=0, step=1, limit=4
    $region2: #{tpu_custom_call.1} parent=1 // loop_pre_header
      _
    $region3: #{tpu_custom_call.1} parent=1 // loop_header
      %s21 = sphi 0, %s25
      %p22 = scmp.ge.s32.totalorder %s21, 4
      %s28 = sphi 0, %s40
      %s29 = sphi 0, %s36
      %s30 = sphi 0, %s28
      %s31 = sphi 0, %s29
      %s32 = sphi 0, %s30
      %s33 = sphi 0, %s31
      %s45 = sphi 0, %s47
      %s48 = sphi 0, %s45
      %s49 = sphi 0, %s48
      %s65 = sphi 0, %s49
      %s71 = sphi 0, %s73
      %s74 = sphi 0, %s71
      %s75 = sphi 0, %s74
      %s91 = sphi 0, %s75
      %s95 = sphi 0, %s95
      %s97 = sphi 0, %s95
      %s98 = sphi 0, %s97
      %s112 = sphi 0, %s98
      %s116 = sphi 0, %s116
      %s118 = sphi 0, %s116
      %s119 = sphi 0, %s118
      %s133 = sphi 0, %s119
      %s137 = sphi 0, %s137
      %s139 = sphi 0, %s137
      %s140 = sphi 0, %s139
      %s154 = sphi 0, %s140
      %s162 = sphi 0, %s164
      %s165 = sphi 0, %s162
      %s166 = sphi 0, %s165
      %s182 = sphi 0, %s166
    $region4: #{tpu_custom_call.1} parent=1 // loop_header_branch
      %24 = sbr.rel (%p22) target = $region8
    $region5: #{tpu_custom_call.1} parent=1 // loop_body
      %s26 = ssub.s32 %s21, 1
      %s27 = ssub.s32 %s21, 2
      %s34 = sadd.s32 1, %s29
      %p35 = scmp.ge.s32.totalorder %s34, 1
      %s36 = scalar_select %p35, 0, %s34
      %s37 = sadd.s32 1, %s28
      %s38 = scalar_select %p35, %s37, %s28
      %p39 = scmp.ge.s32.totalorder %s38, 2
      %s40 = scalar_select %p39, 0, %s38
      %s41 = ssub.s32 %s28, %s40
      %s42 = ssub.s32 %s29, %s36
      %s43 = sor.u32 %s41, %s42
      %p44 = scmp.eq.s32.totalorder %s43, 0
      %s46 = sadd.s32 %s45, 1
      %s47 = scalar_select %p44, %s45, %s46
      %p50 = pneg %p44
      %p51 = scmp.eq.s32.totalorder %s21, 1
      %p52 = por %p50, %p51
      %p53 = scmp.ne.s32.totalorder %s45, %s48
      %p54 = scmp.eq.s32.totalorder %s21, 0
      %p55 = por %p53, %p54
      %p56 = scmp.ne.s32.totalorder %s45, %s48
      %p57 = scmp.eq.s32.totalorder %s26, 1
      %p58 = por %p56, %p57
      %p59 = scmp.ne.s32.totalorder %s48, %s49
      %p60 = scmp.eq.s32.totalorder %s26, 0
      %p61 = por %p59, %p60
      %p62 = scmp.ne.s32.totalorder %s48, %s49
      %p63 = scmp.eq.s32.totalorder %s27, 1
      %p64 = por %p62, %p63
      %p66 = scmp.ne.s32.totalorder %s49, %s65
      %p67 = scmp.eq.s32.totalorder %s27, 0
      %p68 = por %p66, %p67
      %s69 = ssub.s32 %s28, %s40
      %p70 = scmp.eq.s32.totalorder %s69, 0
      %s72 = sadd.s32 %s71, 1
      %s73 = scalar_select %p70, %s71, %s72
      %p76 = pneg %p70
      %p77 = scmp.eq.s32.totalorder %s21, 1
      %p78 = por %p76, %p77
      %p79 = scmp.ne.s32.totalorder %s71, %s74
      %p80 = scmp.eq.s32.totalorder %s21, 0
      %p81 = por %p79, %p80
      %p82 = scmp.ne.s32.totalorder %s71, %s74
      %p83 = scmp.eq.s32.totalorder %s26, 1
      %p84 = por %p82, %p83
      %p85 = scmp.ne.s32.totalorder %s74, %s75
      %p86 = scmp.eq.s32.totalorder %s26, 0
      %p87 = por %p85, %p86
      %p88 = scmp.ne.s32.totalorder %s74, %s75
      %p89 = scmp.eq.s32.totalorder %s27, 1
      %p90 = por %p88, %p89
      %p92 = scmp.ne.s32.totalorder %s75, %s91
      %p93 = scmp.eq.s32.totalorder %s27, 0
      %p94 = por %p92, %p93
      %s96 = sadd.s32 %s95, 1
      %p99 = scmp.eq.s32.totalorder %s21, 1
      %p100 = scmp.ne.s32.totalorder %s95, %s97
      %p101 = scmp.eq.s32.totalorder %s21, 0
      %p102 = por %p100, %p101
      %p103 = scmp.ne.s32.totalorder %s95, %s97
      %p104 = scmp.eq.s32.totalorder %s26, 1
      %p105 = por %p103, %p104
      %p106 = scmp.ne.s32.totalorder %s97, %s98
      %p107 = scmp.eq.s32.totalorder %s26, 0
      %p108 = por %p106, %p107
      %p109 = scmp.ne.s32.totalorder %s97, %s98
      %p110 = scmp.eq.s32.totalorder %s27, 1
      %p111 = por %p109, %p110
      %p113 = scmp.ne.s32.totalorder %s98, %s112
      %p114 = scmp.eq.s32.totalorder %s27, 0
      %p115 = por %p113, %p114
      %s117 = sadd.s32 %s116, 1
      %p120 = scmp.eq.s32.totalorder %s21, 1
      %p121 = scmp.ne.s32.totalorder %s116, %s118
      %p122 = scmp.eq.s32.totalorder %s21, 0
      %p123 = por %p121, %p122
      %p124 = scmp.ne.s32.totalorder %s116, %s118
      %p125 = scmp.eq.s32.totalorder %s26, 1
      %p126 = por %p124, %p125
      %p127 = scmp.ne.s32.totalorder %s118, %s119
      %p128 = scmp.eq.s32.totalorder %s26, 0
      %p129 = por %p127, %p128
      %p130 = scmp.ne.s32.totalorder %s118, %s119
      %p131 = scmp.eq.s32.totalorder %s27, 1
      %p132 = por %p130, %p131
      %p134 = scmp.ne.s32.totalorder %s119, %s133
      %p135 = scmp.eq.s32.totalorder %s27, 0
      %p136 = por %p134, %p135
      %s138 = sadd.s32 %s137, 1
      %p141 = scmp.eq.s32.totalorder %s21, 1
      %p142 = scmp.ne.s32.totalorder %s137, %s139
      %p143 = scmp.eq.s32.totalorder %s21, 0
      %p144 = por %p142, %p143
      %p145 = scmp.ne.s32.totalorder %s137, %s139
      %p146 = scmp.eq.s32.totalorder %s26, 1
      %p147 = por %p145, %p146
      %p148 = scmp.ne.s32.totalorder %s139, %s140
      %p149 = scmp.eq.s32.totalorder %s26, 0
      %p150 = por %p148, %p149
      %p151 = scmp.ne.s32.totalorder %s139, %s140
      %p152 = scmp.eq.s32.totalorder %s27, 1
      %p153 = por %p151, %p152
      %p155 = scmp.ne.s32.totalorder %s140, %s154
      %p156 = scmp.eq.s32.totalorder %s27, 0
      %p157 = por %p155, %p156
      %s158 = ssub.s32 %s28, %s40
      %s159 = ssub.s32 %s29, %s36
      %s160 = sor.u32 %s158, %s159
      %p161 = scmp.eq.s32.totalorder %s160, 0
      %s163 = sadd.s32 %s162, 1
      %s164 = scalar_select %p161, %s162, %s163
      %p167 = pneg %p161
      %p168 = scmp.eq.s32.totalorder %s21, 1
      %p169 = por %p167, %p168
      %p170 = scmp.ne.s32.totalorder %s162, %s165
      %p171 = scmp.eq.s32.totalorder %s21, 0
      %p172 = por %p170, %p171
      %p173 = scmp.ne.s32.totalorder %s162, %s165
      %p174 = scmp.eq.s32.totalorder %s26, 1
      %p175 = por %p173, %p174
      %p176 = scmp.ne.s32.totalorder %s165, %s166
      %p177 = scmp.eq.s32.totalorder %s26, 0
      %p178 = por %p176, %p177
      %p179 = scmp.ne.s32.totalorder %s165, %s166
      %p180 = scmp.eq.s32.totalorder %s27, 1
      %p181 = por %p179, %p180
      %p183 = scmp.ne.s32.totalorder %s166, %s182
      %p184 = scmp.eq.s32.totalorder %s27, 0
      %p185 = por %p183, %p184
      %p186 = scmp.le.s32.totalorder 1, %s21
      %p187 = scmp.lt.s32.totalorder %s21, 3
      %p188 = pnand %p186, %p187
      %p189 = pneg %p188
      // Predicated region
      $region9: #{tpu_custom_call.1} parent=5 // pred_check
        _
      $region10: #{tpu_custom_call.1} parent=5 // pred_check_branch
        %191 = sbr.rel (%p188) target = $region12
      $region11: #{tpu_custom_call.1} parent=5 // pred_region
        %s192 = ssub.s32 %s21, 1
        // Predicated region
        $region13: #{tpu_custom_call.1} parent=11 // pred_check
          %p193 = pneg %p108
        $region14: #{tpu_custom_call.1} parent=11 // pred_check_branch
          %195 = sbr.rel (%p193) target = $region16
        $region15: #{tpu_custom_call.1} parent=11 // pred_region
          %s197 = ssub.s32 256, 256
          %198 = vsyncadd [#allocation7], %s197
          %s199 = sshll.u32 [#allocation8], 4
          %s200 = int_to_ptr.vmem [resolvable:$true] %s199
          %205 = dma.hbm_to_vmem [thread:$0]  %s2, 256, %s200, [#allocation7], 64, 64, 4
        $region16: #{tpu_custom_call.1} parent=11 // pred_fallthru
          _
        // Predicated region
        $region17: #{tpu_custom_call.1} parent=11 // pred_check
          %p206 = pneg %p129
        $region18: #{tpu_custom_call.1} parent=11 // pred_check_branch
          %208 = sbr.rel (%p206) target = $region20
        $region19: #{tpu_custom_call.1} parent=11 // pred_region
          %s210 = ssub.s32 256, 256
          %211 = vsyncadd [#allocation10], %s210
          %s212 = sshll.u32 [#allocation9], 4
          %s213 = int_to_ptr.vmem [resolvable:$true] %s212
          %218 = dma.hbm_to_vmem [thread:$0]  %s3, 256, %s213, [#allocation10], 64, 64, 4
        $region20: #{tpu_custom_call.1} parent=11 // pred_fallthru
          _
        // Predicated region
        $region21: #{tpu_custom_call.1} parent=11 // pred_check
          %p219 = pneg %p150
        $region22: #{tpu_custom_call.1} parent=11 // pred_check_branch
          %221 = sbr.rel (%p219) target = $region24
        $region23: #{tpu_custom_call.1} parent=11 // pred_region
          _
        $region24: #{tpu_custom_call.1} parent=11 // pred_fallthru
          _
      $region12: #{tpu_custom_call.1} parent=5 // pred_fallthru
        _
      %p222 = scmp.lt.s32.totalorder %s21, 2
      // Predicated region
      $region25: #{tpu_custom_call.1} parent=5 // pred_check
        %p223 = pneg %p222
      $region26: #{tpu_custom_call.1} parent=5 // pred_check_branch
        %225 = sbr.rel (%p223) target = $region28
      $region27: #{tpu_custom_call.1} parent=5 // pred_region
        // Predicated region
        $region29: #{tpu_custom_call.1} parent=27 // pred_check
          %p226 = pneg %p55
        $region30: #{tpu_custom_call.1} parent=27 // pred_check_branch
          %228 = sbr.rel (%p226) target = $region32
        $region31: #{tpu_custom_call.1} parent=27 // pred_region
          %s229 = sand.u32 %s45, 1
          %s230 = scalar_lea.sflag [#allocation4], %s229
          %s231 = sand.u32 %s45, 1
          %s232 = smul.addr %s231, 4
          %s233 = scalar_lea.vmem [#allocation3], %s232
          %s235 = ssub.s32 64, 64
          %236 = vsyncadd %s230, %s235
          %s237 = sadd.s32 %s29, %s28
          %s238 = smul.addr %s237, 64
          %s239 = scalar_lea.hbm %s0, %s238
          %s241 = sshll.u32 %s233, 4
          %s242 = int_to_ptr.vmem [resolvable:$true] %s241
          %244 = dma.hbm_to_vmem [thread:$0]  %s239, 64, %s242, %s230
        $region32: #{tpu_custom_call.1} parent=27 // pred_fallthru
          _
        // Predicated region
        $region33: #{tpu_custom_call.1} parent=27 // pred_check
          %p245 = pneg %p81
        $region34: #{tpu_custom_call.1} parent=27 // pred_check_branch
          %247 = sbr.rel (%p245) target = $region36
        $region35: #{tpu_custom_call.1} parent=27 // pred_region
          %s248 = sand.u32 %s21, 1
          %s249 = scalar_lea.sflag [#allocation7], %s248
          %s250 = sand.u32 %s71, 1
          %s251 = smul.addr %s250, 4
          %s252 = scalar_lea.vmem [#allocation6], %s251
          %s254 = ssub.s32 64, 64
          %255 = vsyncadd %s249, %s254
          %s256 = smul.addr %s28, 64
          %s257 = scalar_lea.hbm %s1, %s256
          %s259 = sshll.u32 %s252, 4
          %s260 = int_to_ptr.vmem [resolvable:$true] %s259
          %262 = dma.hbm_to_vmem [thread:$0]  %s257, 64, %s260, %s249
        $region36: #{tpu_custom_call.1} parent=27 // pred_fallthru
          _
      $region28: #{tpu_custom_call.1} parent=5 // pred_fallthru
        _
      %p263 = scmp.le.s32.totalorder 1, %s21
      %p264 = scmp.lt.s32.totalorder %s21, 3
      %p265 = pnand %p263, %p264
      %p266 = pneg %p265
      // Predicated region
      $region37: #{tpu_custom_call.1} parent=5 // pred_check
        _
      $region38: #{tpu_custom_call.1} parent=5 // pred_check_branch
        %268 = sbr.rel (%p265) target = $region40
      $region39: #{tpu_custom_call.1} parent=5 // pred_region
        %s269 = ssub.s32 %s21, 1
        %s270 = sand.u32 %s48, 1
        %s271 = scalar_lea.sflag [#allocation4], %s270
        %s272 = sand.u32 %s48, 1
        %s273 = smul.addr %s272, 4
        %s274 = scalar_lea.vmem [#allocation3], %s273
        // Predicated region
        $region41: #{tpu_custom_call.1} parent=39 // pred_check
          %p275 = pneg %p61
        $region42: #{tpu_custom_call.1} parent=39 // pred_check_branch
          %277 = sbr.rel (%p275) target = $region44
        $region43: #{tpu_custom_call.1} parent=39 // pred_region
          %278 = dma.done %s271, 64
        $region44: #{tpu_custom_call.1} parent=39 // pred_fallthru
          _
        %s279 = sand.u32 %s26, 1
        %s280 = scalar_lea.sflag [#allocation7], %s279
        %s281 = sand.u32 %s74, 1
        %s282 = smul.addr %s281, 4
        %s283 = scalar_lea.vmem [#allocation6], %s282
        // Predicated region
        $region45: #{tpu_custom_call.1} parent=39 // pred_check
          %p284 = pneg %p87
        $region46: #{tpu_custom_call.1} parent=39 // pred_check_branch
          %286 = sbr.rel (%p284) target = $region48
        $region47: #{tpu_custom_call.1} parent=39 // pred_region
          %287 = dma.done %s280, 64
        $region48: #{tpu_custom_call.1} parent=39 // pred_fallthru
          _
        // Predicated region
        $region49: #{tpu_custom_call.1} parent=39 // pred_check
          %p288 = pneg %p108
        $region50: #{tpu_custom_call.1} parent=39 // pred_check_branch
          %290 = sbr.rel (%p288) target = $region52
        $region51: #{tpu_custom_call.1} parent=39 // pred_region
          %291 = dma.done [#allocation7], 256
        $region52: #{tpu_custom_call.1} parent=39 // pred_fallthru
          _
        // Predicated region
        $region53: #{tpu_custom_call.1} parent=39 // pred_check
          %p292 = pneg %p129
        $region54: #{tpu_custom_call.1} parent=39 // pred_check_branch
          %294 = sbr.rel (%p292) target = $region56
        $region55: #{tpu_custom_call.1} parent=39 // pred_region
          %295 = dma.done [#allocation10], 256
        $region56: #{tpu_custom_call.1} parent=39 // pred_fallthru
          _
        %s296 = sand.u32 %s48, 1
        %s297 = scalar_lea.sflag [#allocation4], %s296
        %s298 = sand.u32 %s48, 1
        %s299 = smul.addr %s298, 4
        %s300 = scalar_lea.vmem [#allocation3], %s299
        %p301 = pneg %p61
        %p302 = pneg %p58
        %s303 = sand.u32 %s26, 1
        %s304 = scalar_lea.sflag [#allocation7], %s303
        %s305 = sand.u32 %s74, 1
        %s306 = smul.addr %s305, 4
        %s307 = scalar_lea.vmem [#allocation6], %s306
        %p308 = pneg %p87
        %p309 = pneg %p84
        %p310 = pneg %p108
        %p311 = pneg %p105
        %p312 = pneg %p129
        %p313 = pneg %p126
        %p314 = pneg %p150
        %p315 = pneg %p147
        %p316 = pneg %p178
        %p317 = pneg %p175
        %s318 = sand.u32 %s165, 1
        %s319 = scalar_lea.sflag [#allocation5], %s318
        %s320 = sand.u32 %s165, 1
        %s321 = smul.addr %s320, 8
        %s322 = scalar_lea.vmem [#allocation11], %s321
        %p324 = scmp.eq.s32.totalorder %s31, 0
        // Predicated region
        $region57: #{tpu_custom_call.1} parent=39 // pred_check
          %p325 = pneg %p324
        $region58: #{tpu_custom_call.1} parent=39 // pred_check_branch
          %327 = sbr.rel (%p325) target = $region60
        $region59: #{tpu_custom_call.1} parent=39 // pred_region
          %v328 = vld [vmem:[%s283] sm:$0xf]
          %v329 = vld [vmem:[#allocation9] sm:$0xf]
          %v330 = vld [vmem:[#allocation9 + $0x4] sm:$0xf]
          %v331 = vld [vmem:[#allocation9 + $0x8] sm:$0xf]
          %v332 = vld [vmem:[#allocation9 + $0xc] sm:$0xf]
          %v333 = vld [vmem:[%s4] sm:$0x1]
          %v335 = vlaneseq
          %v336 = vshrl.u32 %v335, 7
          %v337 = vsub.s32 0, %v336
          %v338 = vrot.slane %v333, %v337
          %v344 = vunpack.c.l.b16 %v329
          %v345 = vunpack.c.l.b16 %v330
          %v346 = vunpack.c.l.b16 %v331
          %v347 = vunpack.c.l.b16 %v332
          %v348 = vpack.c.b16 %v345, %v344
          %v349 = vpack.c.b16 %v347, %v346
          %vm352 = vcmask 261120
          %v354 = vsel %vm352, %v328, 0
          %356 = vmatprep.subr.bf16.mxu0 0
          %357 = vmatpush1.bf16.msra.mxu0 %v348
          %358 = vmatprep.subr.bf16.mxu0 0
          %359 = vmatpush1.bf16.msra.mxu0 %v349
          %360 = vmatprep.subr.bf16.mxu0 0
          %361 = vmatpush1.bf16.msra.mxu0 0
          %362 = vmatprep.subr.bf16.mxu0 0
          %363 = vmatpush1.bf16.msra.mxu0 0
          %364 = vmatprep.subr.bf16.mxu0 0
          %365 = vmatpush1.bf16.msra.mxu0 0
          %366 = vmatprep.subr.bf16.mxu0 0
          %367 = vmatpush1.bf16.msra.mxu0 0
          %368 = vmatprep.subr.bf16.mxu0 0
          %369 = vmatpush1.bf16.msra.mxu0 0
          %370 = vmatprep.subr.bf16.mxu0 0
          %371 = vmatpush1.bf16.msra.mxu0 0
          %372 = vmatprep.subr.bf16.mxu0 0
          %373 = vmatpush1.bf16.msra.mxu0 0
          %374 = vmatprep.subr.bf16.mxu0 0
          %375 = vmatpush1.bf16.msra.mxu0 0
          %376 = vmatprep.subr.bf16.mxu0 0
          %377 = vmatpush1.bf16.msra.mxu0 0
          %378 = vmatprep.subr.bf16.mxu0 0
          %379 = vmatpush1.bf16.msra.mxu0 0
          %380 = vmatprep.subr.bf16.mxu0 0
          %381 = vmatpush1.bf16.msra.mxu0 0
          %382 = vmatprep.subr.bf16.mxu0 0
          %383 = vmatpush1.bf16.msra.mxu0 0
          %384 = vmatprep.subr.bf16.mxu0 0
          %385 = vmatpush1.bf16.msra.mxu0 0
          %386 = vmatprep.subr.bf16.mxu0 0
          %387 = vmatpush1.bf16.msra.mxu0 0
          %388 = vmatprep.mubr.bf16.mxu0 0
          %389 = vmatmul.mubr.bf16.gmra.mrb[0].mxu0 %v354
          %v390 = vpop.f32.mrb[0].mxu0
          %v391 = vadd.f32 %v338, %v390
          %v392 = vpop.f32.mrb[0].mxu0
          %v393 = vpop.f32.mrb[0].mxu0
          %v394 = vpop.f32.mrb[0].mxu0
          %395 = vdwg.mxu0
          %v396 = vmax.f32 %v391, 0.0
          %v397 = vpack.c.bf16 %v396, %v396
          %398 = vst [vmem:[#allocation2] sm:$0xf] %v397
        $region60: #{tpu_custom_call.1} parent=39 // pred_fallthru
          _
        %v399 = vld [vmem:[%s274] sm:$0xf]
        %v400 = vld [vmem:[#allocation8] sm:$0xf]
        %v401 = vld [vmem:[#allocation8 + $0x4] sm:$0xf]
        %v402 = vld [vmem:[#allocation8 + $0x8] sm:$0xf]
        %v403 = vld [vmem:[#allocation8 + $0xc] sm:$0xf]
        %v408 = vunpack.c.l.b16 %v400
        %v409 = vunpack.c.l.b16 %v401
        %v410 = vunpack.c.l.b16 %v402
        %v411 = vunpack.c.l.b16 %v403
        %v412 = vpack.c.b16 %v409, %v408
        %v413 = vpack.c.b16 %v411, %v410
        %vm416 = vcmask 261120
        %v418 = vsel %vm416, %v399, 0
        %420 = vmatprep.subr.bf16.mxu0 0
        %421 = vmatpush1.bf16.msra.mxu0 %v412
        %422 = vmatprep.subr.bf16.mxu0 0
        %423 = vmatpush1.bf16.msra.mxu0 %v413
        %424 = vmatprep.subr.bf16.mxu0 0
        %425 = vmatpush1.bf16.msra.mxu0 0
        %426 = vmatprep.subr.bf16.mxu0 0
        %427 = vmatpush1.bf16.msra.mxu0 0
        %428 = vmatprep.subr.bf16.mxu0 0
        %429 = vmatpush1.bf16.msra.mxu0 0
        %430 = vmatprep.subr.bf16.mxu0 0
        %431 = vmatpush1.bf16.msra.mxu0 0
        %432 = vmatprep.subr.bf16.mxu0 0
        %433 = vmatpush1.bf16.msra.mxu0 0
        %434 = vmatprep.subr.bf16.mxu0 0
        %435 = vmatpush1.bf16.msra.mxu0 0
        %436 = vmatprep.subr.bf16.mxu0 0
        %437 = vmatpush1.bf16.msra.mxu0 0
        %438 = vmatprep.subr.bf16.mxu0 0
        %439 = vmatpush1.bf16.msra.mxu0 0
        %440 = vmatprep.subr.bf16.mxu0 0
        %441 = vmatpush1.bf16.msra.mxu0 0
        %442 = vmatprep.subr.bf16.mxu0 0
        %443 = vmatpush1.bf16.msra.mxu0 0
        %444 = vmatprep.subr.bf16.mxu0 0
        %445 = vmatpush1.bf16.msra.mxu0 0
        %446 = vmatprep.subr.bf16.mxu0 0
        %447 = vmatpush1.bf16.msra.mxu0 0
        %448 = vmatprep.subr.bf16.mxu0 0
        %449 = vmatpush1.bf16.msra.mxu0 0
        %450 = vmatprep.subr.bf16.mxu0 0
        %451 = vmatpush1.bf16.msra.mxu0 0
        %452 = vmatprep.mubr.bf16.mxu0 0
        %453 = vmatmul.mubr.bf16.gmra.mrb[0].mxu0 %v418
        %v454 = vpop.f32.mrb[0].mxu0
        %v455 = vadd.f32 0.0, %v454
        %v456 = vpop.f32.mrb[0].mxu0
        %v457 = vpop.f32.mrb[0].mxu0
        %v458 = vpop.f32.mrb[0].mxu0
        %459 = vdwg.mxu0
        %v460 = vmax.f32 %v455, 0.0
        %v461 = vpack.c.bf16 %v460, %v460
        %v462 = vld [vmem:[#allocation2] sm:$0xf]
        %463 = vmatprep.subr.bf16.mxu0 0
        %464 = vmatpush1.bf16.xpose.msra.mxu0 %v462
        %465 = vmatprep.subr.bf16.mxu0 0
        %466 = vmatpush1.bf16.xpose.msra.mxu0 0
        %467 = vmatprep.subr.bf16.mxu0 0
        %468 = vmatpush1.bf16.xpose.msra.mxu0 0
        %469 = vmatprep.subr.bf16.mxu0 0
        %470 = vmatpush1.bf16.xpose.msra.mxu0 0
        %471 = vmatprep.subr.bf16.mxu0 0
        %472 = vmatpush1.bf16.xpose.msra.mxu0 0
        %473 = vmatprep.subr.bf16.mxu0 0
        %474 = vmatpush1.bf16.xpose.msra.mxu0 0
        %475 = vmatprep.subr.bf16.mxu0 0
        %476 = vmatpush1.bf16.xpose.msra.mxu0 0
        %477 = vmatprep.subr.bf16.mxu0 0
        %478 = vmatpush1.bf16.xpose.msra.mxu0 0
        %479 = vmatprep.subr.bf16.mxu0 0
        %480 = vmatpush1.bf16.xpose.msra.mxu0 0
        %481 = vmatprep.subr.bf16.mxu0 0
        %482 = vmatpush1.bf16.xpose.msra.mxu0 0
        %483 = vmatprep.subr.bf16.mxu0 0
        %484 = vmatpush1.bf16.xpose.msra.mxu0 0
        %485 = vmatprep.subr.bf16.mxu0 0
        %486 = vmatpush1.bf16.xpose.msra.mxu0 0
        %487 = vmatprep.subr.bf16.mxu0 0
        %488 = vmatpush1.bf16.xpose.msra.mxu0 0
        %489 = vmatprep.subr.bf16.mxu0 0
        %490 = vmatpush1.bf16.xpose.msra.mxu0 0
        %491 = vmatprep.subr.bf16.mxu0 0
        %492 = vmatpush1.bf16.xpose.msra.mxu0 0
        %493 = vmatprep.subr.bf16.mxu0 0
        %494 = vmatpush1.bf16.xpose.msra.mxu0 0
        %495 = vmatprep.mubr.bf16.mxu0 0
        %496 = vmatmul.mubr.bf16.gmra.mrb[0].mxu0 %v461
        %v497 = vpop.f32.mrb[0].mxu0
        %v498 = vadd.f32 0.0, %v497
        %v499 = vpop.f32.mrb[0].mxu0
        %v500 = vpop.f32.mrb[0].mxu0
        %v501 = vpop.f32.mrb[0].mxu0
        %502 = vdwg.mxu0
        %vm503 = vcmask 64512
        %504 = vst.msk [vmem:[%s322] sm:$0xff] %vm503, %v498
        %s505 = sand.u32 %s165, 1
        %s506 = scalar_lea.sflag [#allocation5], %s505
        %s507 = sand.u32 %s165, 1
        %s508 = smul.addr %s507, 8
        %s509 = scalar_lea.vmem [#allocation11], %s508
        // Predicated region
        $region61: #{tpu_custom_call.1} parent=39 // pred_check
          %p510 = pneg %p175
        $region62: #{tpu_custom_call.1} parent=39 // pred_check_branch
          %512 = sbr.rel (%p510) target = $region64
        $region63: #{tpu_custom_call.1} parent=39 // pred_region
          %s514 = ssub.s32 128, 128
          %515 = vsyncadd %s506, %s514
          %s516 = sadd.s32 %s31, %s30
          %s517 = smul.addr %s516, 128
          %s518 = scalar_lea.hbm %s5, %s517
          %s520 = sshll.u32 %s509, 4
          %s521 = int_to_ptr.vmem [resolvable:$true] %s520
          %523 = dma.vmem_to_hbm [thread:$0]  %s521, 128, %s518, %s506
        $region64: #{tpu_custom_call.1} parent=39 // pred_fallthru
          _
      $region40: #{tpu_custom_call.1} parent=5 // pred_fallthru
        _
      %p524 = scmp.le.s32.totalorder 2, %s21
      // Predicated region
      $region65: #{tpu_custom_call.1} parent=5 // pred_check
        %p525 = pneg %p524
      $region66: #{tpu_custom_call.1} parent=5 // pred_check_branch
        %527 = sbr.rel (%p525) target = $region68
      $region67: #{tpu_custom_call.1} parent=5 // pred_region
        %s528 = ssub.s32 %s21, 2
        // Predicated region
        $region69: #{tpu_custom_call.1} parent=67 // pred_check
          %p529 = pneg %p181
        $region70: #{tpu_custom_call.1} parent=67 // pred_check_branch
          %531 = sbr.rel (%p529) target = $region72
        $region71: #{tpu_custom_call.1} parent=67 // pred_region
          %s532 = sand.u32 %s166, 1
          %s533 = scalar_lea.sflag [#allocation5], %s532
          %s534 = sand.u32 %s166, 1
          %s535 = smul.addr %s534, 8
          %s536 = scalar_lea.vmem [#allocation11], %s535
          %537 = dma.done %s533, 128
        $region72: #{tpu_custom_call.1} parent=67 // pred_fallthru
          _
      $region68: #{tpu_custom_call.1} parent=5 // pred_fallthru
        _
    $region6: #{tpu_custom_call.1} parent=1 // loop_footer
      %s25 = sadd.s32 1, %s21
    $region7: #{tpu_custom_call.1} parent=1 // loop_footer_branch
      %20 = sbr.rel target = $region3
    $region8: #{tpu_custom_call.1} parent=1 // loop_exit
      _
    %538 = vsyncpa [#allocation4], 1
    %s539 = scalar_lea.sflag [#allocation4], 1
    %540 = vsyncpa %s539, 1
    %541 = vsyncpa [#allocation7], 1
    %s542 = scalar_lea.sflag [#allocation7], 1
    %543 = vsyncpa %s542, 1
    %544 = vsyncpa [#allocation10], 1
    %545 = vsyncpa [#allocation5], 1
    %s546 = scalar_lea.sflag [#allocation5], 1
    %547 = vsyncpa %s546, 1

</llo_original>
